<compile_context>
chip_gen: v7x
topology: tpu7x:2x2x1
jax: 0.10.0
libtpu: 0.0.40
codegen_flags: <defaults>
</compile_context>

<pallas_src>
import functools

import jax
import jax.numpy as jnp
from jax.experimental import pallas as pl
from jax.experimental.pallas import tpu as pltpu

NEG_SLOPE = 0.01          # nn.LeakyReLU default negative_slope
LANES = 128               # TPU lane width; all kernel operands are lane-padded to this
HP = jax.lax.Precision.HIGHEST


def _leaky(x):
    return jnp.where(x > 0, x, NEG_SLOPE * x)


def _round_up(x, m):
    return ((x + m - 1) // m) * m


def make_cage_kernel(B_pad, P, pooling, label_dim, offs):
    """Kernel body. B_pad: batch padded to 8. P: object parts per sample."""
    PP1 = P + 1
    N = PP1 * B_pad  # part rows, p-major: row = p * B_pad + b

    def kernel(part_ids_ref, tos_ids_ref, w_ref, out_ref):
        f32 = jnp.float32

        def wblk(name):                      # one 128x128 parameter block
            r = offs[name]
            return w_ref[r:r + LANES, :]

        def brow(i):                         # one bias row [1, 128]
            r = offs['bias'] + i
            return w_ref[r:r + 1, :]

        # ---- PartEncoder: embedding gather fused as one-hot @ (aff_tab·Wp) ----
        # part_ids_ref[0] = affordance ids, part_ids_ref[1] = Va + "material" ids
        lane_n = jax.lax.broadcasted_iota(jnp.int32, (N, LANES), 1)
        part_oh = ((lane_n == part_ids_ref[0]).astype(f32)
                   + (lane_n == part_ids_ref[1]).astype(f32))           # [N, 128]
        pe = _leaky(jnp.dot(part_oh, wblk('tatm'),
                            preferred_element_type=f32) + brow(0))      # [N, 128]

        # ---- ObjectEncoder pooling + GraspEncoder (8-row aligned slices) -------
        pooled = pe[0:B_pad]
        for p in range(1, P):
            blk = pe[p * B_pad:(p + 1) * B_pad]
            pooled = jnp.maximum(pooled, blk) if pooling == 'max' else pooled + blk
        if pooling != 'max':
            pooled = pooled * (1.0 / P)
        grasp = pe[P * B_pad:(P + 1) * B_pad]                           # [B_pad, 128]

        # ---- fc1 as split partial matmuls (no lane-axis concat) ---------------
        lane_b = jax.lax.broadcasted_iota(jnp.int32, (B_pad, LANES), 1)
        tos_oh = ((lane_b == tos_ids_ref[0]).astype(f32)
                  + (lane_b == tos_ids_ref[1]).astype(f32)
                  + (lane_b == tos_ids_ref[2]).astype(f32))             # [B_pad, 128]
        h1 = _leaky(jnp.dot(tos_oh, wblk('ftos'), preferred_element_type=f32)
                    + jnp.dot(pooled, wblk('w1p'), preferred_element_type=f32)
                    + jnp.dot(grasp, wblk('w1g'), preferred_element_type=f32)
                    + brow(1))
        # TODO(synk): nn.Dropout(p=0.2) treated as inference-mode identity.
        h2 = _leaky(jnp.dot(h1, wblk('w2'), preferred_element_type=f32) + brow(2))
        preds = _leaky(jnp.dot(h2, wblk('w3'), preferred_element_type=f32) + brow(3))

        # ---- LogSoftmax over the first label_dim lanes (padded lanes masked) ---
        valid = lane_b < label_dim
        masked = jnp.where(valid, preds, jnp.float32(-1e30))
        m = jnp.max(masked, axis=1, keepdims=True)
        e = jnp.exp(masked - m)
        lse = jnp.log(jnp.sum(e, axis=1, keepdims=True)) + m
        out_ref[...] = preds - lse                                       # lane-dense store

    return kernel


def _pack_params(params, cfg):
    """Fold embedding tables into the following Linear and pack everything into
    one [6*128+8, 128] f32 slab (row-block offsets are tile-aligned)."""
    A, Dp, L = cfg['aff_dim'], cfg['part_dim'], cfg['label_dim']
    T, O, S = cfg['task_dim'], cfg['obj_dim'], cfg['state_dim']
    Va, Vt, Vo, Vs = cfg['aff_vocab'], cfg['task_vocab'], cfg['obj_vocab'], cfg['state_vocab']
    TOS = T + O + S
    Wp, W1 = params['Wp'], params['W1']
    assert Wp.shape == (2 * A, Dp)
    assert W1.shape == (TOS + 2 * Dp, 16)
    assert 2 * Va <= LANES and Vt + Vo + Vs <= LANES
    assert Dp <= LANES and L <= LANES and 16 <= LANES

    offs = dict(tatm=0, ftos=LANES, w1p=2 * LANES, w1g=3 * LANES,
                w2=4 * LANES, w3=5 * LANES, bias=6 * LANES)
    slab = jnp.zeros((6 * LANES + 8, LANES), jnp.float32)

    def put(s, r, mat):
        mat = mat.astype(jnp.float32)
        return s.at[r:r + mat.shape[0], 0:mat.shape[1]].set(mat)

    # PartEncoder: BOTH columns use the affordance table (faithful to the module's bug)
    slab = put(slab, offs['tatm'],      jnp.dot(params['aff_table'], Wp[:A], precision=HP))
    slab = put(slab, offs['tatm'] + Va, jnp.dot(params['aff_table'], Wp[A:], precision=HP))
    # task/obj/state embedding tables folded with their W1 row-blocks
    slab = put(slab, offs['ftos'],           jnp.dot(params['task_table'], W1[0:T], precision=HP))
    slab = put(slab, offs['ftos'] + Vt,      jnp.dot(params['obj_table'], W1[T:T + O], precision=HP))
    slab = put(slab, offs['ftos'] + Vt + Vo, jnp.dot(params['state_table'], W1[T + O:TOS], precision=HP))
    slab = put(slab, offs['w1p'], W1[TOS:TOS + Dp])
    slab = put(slab, offs['w1g'], W1[TOS + Dp:TOS + 2 * Dp])
    slab = put(slab, offs['w2'], params['W2'])
    slab = put(slab, offs['w3'], params['W3'])
    slab = put(slab, offs['bias'] + 0, params['bp'])
    slab = put(slab, offs['bias'] + 1, params['b1'])
    slab = put(slab, offs['bias'] + 2, params['b2'])
    slab = put(slab, offs['bias'] + 3, params['b3'])
    return slab, offs


def cage_forward_pallas(semantic_features, base_features, params, cfg):
    """Glue: build integer-id tensors + packed parameter slab, one pallas_call."""
    del base_features  # unused: use_deep_base_features=False, use_wide=False (defaults)
    B = semantic_features.shape[0]
    P = (semantic_features.shape[1] - 5) // 2
    PP1 = P + 1
    B_pad = _round_up(max(B, 8), 8)
    Va, Vt, Vo = cfg['aff_vocab'], cfg['task_vocab'], cfg['obj_vocab']
    L = cfg['label_dim']

    sf = semantic_features.astype(jnp.int32)
    parts = sf[:, 5:].reshape(B, P, 2)
    grasps = sf[:, 3:5]
    all_parts = jnp.concatenate([parts, grasps[:, None, :]], axis=1)     # [B, P+1, 2]

    pad_b = ((0, 0), (0, B_pad - B))
    aff_ids = jnp.pad(all_parts[:, :, 0].T, pad_b)                       # [PP1, B_pad]
    mat_ids = jnp.pad(all_parts[:, :, 1].T, pad_b) + Va                  # shifted to [Va, 2Va)
    part_ids = jnp.stack([aff_ids, mat_ids], axis=0).reshape(2, PP1 * B_pad, 1)

    tos_ids = jnp.stack([sf[:, 0], sf[:, 1] + Vt, sf[:, 2] + Vt + Vo], axis=0)  # [3, B]
    tos_ids = jnp.pad(tos_ids, pad_b).reshape(3, B_pad, 1)

    slab, offs = _pack_params(params, cfg)
    kernel = make_cage_kernel(B_pad, P, cfg['pooling'], L, offs)

    out_full = pl.pallas_call(
        kernel,
        out_shape=jax.ShapeDtypeStruct((B_pad, LANES), jnp.float32),
        in_specs=[pl.BlockSpec(memory_space=pltpu.MemorySpace.VMEM)] * 3,
        out_specs=pl.BlockSpec(memory_space=pltpu.MemorySpace.VMEM),
    )(part_ids, tos_ids, slab)
    # TODO(synk): for large batches, add a grid over 128/256-row batch tiles with
    # dimension_semantics=("parallel",) so v7x shards the grid across its 2 TensorCores.
    return out_full[:B, :L]


def cage_forward_ref(semantic_features, base_features, params, cfg):
    """Pure-JAX reference with identical math (correctness check)."""
    del base_features
    B = semantic_features.shape[0]
    P = (semantic_features.shape[1] - 5) // 2
    sf = semantic_features
    tasks, objs, states = sf[:, 0], sf[:, 1], sf[:, 2]
    grasps = sf[:, 3:5]
    parts = sf[:, 5:].reshape(B, P, 2)

    aff_tab = params['aff_table']
    all_parts = jnp.concatenate([parts, grasps[:, None, :]], axis=1)
    pemb = jnp.concatenate([jnp.take(aff_tab, all_parts[:, :, 0], axis=0),
                            jnp.take(aff_tab, all_parts[:, :, 1], axis=0)], axis=-1)
    pe = _leaky(jnp.einsum('bpk,kd->bpd', pemb, params['Wp'], precision=HP) + params['bp'])
    if cfg['pooling'] == 'max':
        pooled = jnp.max(pe[:, :P, :], axis=1)
    else:
        pooled = jnp.mean(pe[:, :P, :], axis=1)
    grasp_enc = pe[:, P, :]
    tos = jnp.concatenate(
        [jnp.take(params['task_table'], tasks, axis=0),
         jnp.take(params['obj_table'], objs, axis=0),
         jnp.take(params['state_table'], states, axis=0)], axis=1)
    deep_in = jnp.concatenate([tos, pooled, grasp_enc], axis=1)
    h1 = _leaky(jnp.dot(deep_in, params['W1'], precision=HP) + params['b1'])
    h2 = _leaky(jnp.dot(h1, params['W2'], precision=HP) + params['b2'])
    preds = _leaky(jnp.dot(h2, params['W3'], precision=HP) + params['b3'])
    return jax.nn.log_softmax(preds, axis=1)


def init_params(key, cfg):
    ks = jax.random.split(key, 12)
    A, Dp, L = cfg['aff_dim'], cfg['part_dim'], cfg['label_dim']
    Din = cfg['task_dim'] + cfg['obj_dim'] + cfg['state_dim'] + 2 * Dp

    def emb(k, v, d, pad0=False):
        t = 0.5 * jax.random.normal(k, (v, d), jnp.float32)
        if pad0:  # nn.Embedding(padding_idx=0): row 0 is zeros
            t = t.at[0].set(0.0)
        return t

    def lin(kw, kb, fan_in, fan_out):
        w = jax.random.normal(kw, (fan_in, fan_out), jnp.float32) / jnp.sqrt(fan_in)
        b = 0.1 * jax.random.normal(kb, (1, fan_out), jnp.float32)
        return w, b

    Wp, bp = lin(ks[4], ks[5], 2 * A, Dp)
    W1, b1 = lin(ks[6], ks[7], Din, 16)
    W2, b2 = lin(ks[8], ks[9], 16, 8)
    W3, b3 = lin(ks[10], ks[11], 8, L)
    return dict(
        aff_table=emb(ks[0], cfg['aff_vocab'], A, pad0=True),
        task_table=emb(ks[1], cfg['task_vocab'], cfg['task_dim']),
        obj_table=emb(ks[2], cfg['obj_vocab'], cfg['obj_dim']),
        state_table=emb(ks[3], cfg['state_vocab'], cfg['state_dim']),
        Wp=Wp, bp=bp, W1=W1, b1=b1, W2=W2, b2=b2, W3=W3, b3=b3,
    )


if __name__ == "__main__":
    cfg = dict(aff_vocab=10, mat_vocab=10, task_vocab=6, obj_vocab=7, state_vocab=4,
               aff_dim=8, mat_dim=8, task_dim=8, obj_dim=8, state_dim=8,
               part_dim=16, label_dim=5, pooling='max', base_features_dim=4)
    B, P = 2, 3  # batch, object parts per sample

    key = jax.random.PRNGKey(0)
    kp, k1, k2, k3, k4, k5, k6 = jax.random.split(key, 7)
    params = init_params(kp, cfg)

    tasks = jax.random.randint(k1, (B, 1), 0, cfg['task_vocab'], jnp.int32)
    objs = jax.random.randint(k2, (B, 1), 0, cfg['obj_vocab'], jnp.int32)
    states = jax.random.randint(k3, (B, 1), 0, cfg['state_vocab'], jnp.int32)
    grasps = jax.random.randint(k4, (B, 2), 1, cfg['aff_vocab'], jnp.int32)
    parts = jax.random.randint(k5, (B, 2 * P), 1, cfg['aff_vocab'], jnp.int32)
    semantic_features = jnp.concatenate([tasks, objs, states, grasps, parts], axis=1)
    base_features = jax.random.normal(k6, (B, cfg['base_features_dim']), jnp.float32)

    fwd = jax.jit(functools.partial(cage_forward_pallas, cfg=cfg))
    out = jax.block_until_ready(fwd(semantic_features, base_features, params))

    ref = cage_forward_ref(semantic_features, base_features, params, cfg)
    assert out.shape == (B, cfg['label_dim'])
    assert jnp.allclose(out, ref, atol=1e-4, rtol=1e-4), (out, ref)

    print("KERNEL_OK")
</pallas_src>

<mosaic_0001>
module attributes {stable_mosaic.version = 11 : i64} {
  func.func @kernel(%arg0: memref<2x32x1xi32, #tpu.memory_space<vmem>>, %arg1: memref<3x8x1xi32, #tpu.memory_space<vmem>>, %arg2: memref<776x128xf32, #tpu.memory_space<vmem>>, %arg3: memref<8x128xf32, #tpu.memory_space<vmem>>) attributes {dimension_semantics = [], scalar_prefetch = 0 : i64, scratch_operands = 0 : i64, tpu.core_type = #tpu.core_type<tc>} {
    %0 = tpu.iota {dimensions = array<i32: 1>} : vector<32x128xi32>
    %c0 = arith.constant 0 : index
    %c0_0 = arith.constant 0 : index
    %c0_1 = arith.constant 0 : index
    %1 = vector.load %arg0[%c0, %c0_0, %c0_1] : memref<2x32x1xi32, #tpu.memory_space<vmem>>, vector<1x32x1xi32>
    %2 = vector.shape_cast %1 : vector<1x32x1xi32> to vector<32x1xi32>
    %3 = vector.broadcast %2 : vector<32x1xi32> to vector<32x128xi32>
    %4 = arith.cmpi eq, %0, %3 : vector<32x128xi32>
    %5 = arith.extui %4 : vector<32x128xi1> to vector<32x128xi32>
    %6 = arith.sitofp %5 : vector<32x128xi32> to vector<32x128xf32>
    %c1 = arith.constant 1 : index
    %c0_2 = arith.constant 0 : index
    %c0_3 = arith.constant 0 : index
    %7 = vector.load %arg0[%c1, %c0_2, %c0_3] : memref<2x32x1xi32, #tpu.memory_space<vmem>>, vector<1x32x1xi32>
    %8 = vector.shape_cast %7 : vector<1x32x1xi32> to vector<32x1xi32>
    %9 = vector.broadcast %8 : vector<32x1xi32> to vector<32x128xi32>
    %10 = arith.cmpi eq, %0, %9 : vector<32x128xi32>
    %11 = arith.extui %10 : vector<32x128xi1> to vector<32x128xi32>
    %12 = arith.sitofp %11 : vector<32x128xi32> to vector<32x128xf32>
    %13 = arith.addf %6, %12 : vector<32x128xf32>
    %c0_4 = arith.constant 0 : index
    %c0_5 = arith.constant 0 : index
    %14 = vector.load %arg2[%c0_4, %c0_5] : memref<776x128xf32, #tpu.memory_space<vmem>>, vector<128x128xf32>
    %cst = arith.constant dense<0.000000e+00> : vector<32x128xf32>
    %15 = tpu.matmul %13, %14, %cst {dimension_numbers = #tpu.dot_dimension_numbers<[1], [0], [0], [1], [0, 0, 1, 1], [], []>} : vector<32x128xf32>, vector<128x128xf32>, vector<32x128xf32> -> vector<32x128xf32>
    %c768 = arith.constant 768 : index
    %c0_6 = arith.constant 0 : index
    %16 = vector.load %arg2[%c768, %c0_6] : memref<776x128xf32, #tpu.memory_space<vmem>>, vector<1x128xf32>
    %17 = vector.broadcast %16 : vector<1x128xf32> to vector<32x128xf32>
    %18 = arith.addf %15, %17 : vector<32x128xf32>
    %cst_7 = arith.constant 0.000000e+00 : f32
    %19 = vector.broadcast %cst_7 : f32 to vector<32x128xf32>
    %20 = arith.cmpf ogt, %18, %19 : vector<32x128xf32>
    %cst_8 = arith.constant 0.00999999977 : f32
    %21 = vector.broadcast %cst_8 : f32 to vector<32x128xf32>
    %22 = arith.mulf %21, %18 : vector<32x128xf32>
    %23 = arith.select %20, %18, %22 : vector<32x128xi1>, vector<32x128xf32>
    %24 = vector.extract_strided_slice %23 {offsets = [0, 0], sizes = [8, 128], strides = [1, 1]} : vector<32x128xf32> to vector<8x128xf32>
    %25 = vector.extract_strided_slice %23 {offsets = [8, 0], sizes = [8, 128], strides = [1, 1]} : vector<32x128xf32> to vector<8x128xf32>
    %26 = arith.maximumf %24, %25 : vector<8x128xf32>
    %27 = vector.extract_strided_slice %23 {offsets = [16, 0], sizes = [8, 128], strides = [1, 1]} : vector<32x128xf32> to vector<8x128xf32>
    %28 = arith.maximumf %26, %27 : vector<8x128xf32>
    %29 = vector.extract_strided_slice %23 {offsets = [24, 0], sizes = [8, 128], strides = [1, 1]} : vector<32x128xf32> to vector<8x128xf32>
    %30 = tpu.iota {dimensions = array<i32: 1>} : vector<8x128xi32>
    %c0_9 = arith.constant 0 : index
    %c0_10 = arith.constant 0 : index
    %c0_11 = arith.constant 0 : index
    %31 = vector.load %arg1[%c0_9, %c0_10, %c0_11] : memref<3x8x1xi32, #tpu.memory_space<vmem>>, vector<1x8x1xi32>
    %32 = vector.shape_cast %31 : vector<1x8x1xi32> to vector<8x1xi32>
    %33 = vector.broadcast %32 : vector<8x1xi32> to vector<8x128xi32>
    %34 = arith.cmpi eq, %30, %33 : vector<8x128xi32>
    %35 = arith.extui %34 : vector<8x128xi1> to vector<8x128xi32>
    %36 = arith.sitofp %35 : vector<8x128xi32> to vector<8x128xf32>
    %c1_12 = arith.constant 1 : index
    %c0_13 = arith.constant 0 : index
    %c0_14 = arith.constant 0 : index
    %37 = vector.load %arg1[%c1_12, %c0_13, %c0_14] : memref<3x8x1xi32, #tpu.memory_space<vmem>>, vector<1x8x1xi32>
    %38 = vector.shape_cast %37 : vector<1x8x1xi32> to vector<8x1xi32>
    %39 = vector.broadcast %38 : vector<8x1xi32> to vector<8x128xi32>
    %40 = arith.cmpi eq, %30, %39 : vector<8x128xi32>
    %41 = arith.extui %40 : vector<8x128xi1> to vector<8x128xi32>
    %42 = arith.sitofp %41 : vector<8x128xi32> to vector<8x128xf32>
    %43 = arith.addf %36, %42 : vector<8x128xf32>
    %c2 = arith.constant 2 : index
    %c0_15 = arith.constant 0 : index
    %c0_16 = arith.constant 0 : index
    %44 = vector.load %arg1[%c2, %c0_15, %c0_16] : memref<3x8x1xi32, #tpu.memory_space<vmem>>, vector<1x8x1xi32>
    %45 = vector.shape_cast %44 : vector<1x8x1xi32> to vector<8x1xi32>
    %46 = vector.broadcast %45 : vector<8x1xi32> to vector<8x128xi32>
    %47 = arith.cmpi eq, %30, %46 : vector<8x128xi32>
    %48 = arith.extui %47 : vector<8x128xi1> to vector<8x128xi32>
    %49 = arith.sitofp %48 : vector<8x128xi32> to vector<8x128xf32>
    %50 = arith.addf %43, %49 : vector<8x128xf32>
    %c128 = arith.constant 128 : index
    %c0_17 = arith.constant 0 : index
    %51 = vector.load %arg2[%c128, %c0_17] : memref<776x128xf32, #tpu.memory_space<vmem>>, vector<128x128xf32>
    %cst_18 = arith.constant dense<0.000000e+00> : vector<8x128xf32>
    %52 = tpu.matmul %50, %51, %cst_18 {dimension_numbers = #tpu.dot_dimension_numbers<[1], [0], [0], [1], [0, 0, 1, 1], [], []>} : vector<8x128xf32>, vector<128x128xf32>, vector<8x128xf32> -> vector<8x128xf32>
    %c256 = arith.constant 256 : index
    %c0_19 = arith.constant 0 : index
    %53 = vector.load %arg2[%c256, %c0_19] : memref<776x128xf32, #tpu.memory_space<vmem>>, vector<128x128xf32>
    %cst_20 = arith.constant dense<0.000000e+00> : vector<8x128xf32>
    %54 = tpu.matmul %28, %53, %cst_20 {dimension_numbers = #tpu.dot_dimension_numbers<[1], [0], [0], [1], [0, 0, 1, 1], [], []>} : vector<8x128xf32>, vector<128x128xf32>, vector<8x128xf32> -> vector<8x128xf32>
    %55 = arith.addf %52, %54 : vector<8x128xf32>
    %c384 = arith.constant 384 : index
    %c0_21 = arith.constant 0 : index
    %56 = vector.load %arg2[%c384, %c0_21] : memref<776x128xf32, #tpu.memory_space<vmem>>, vector<128x128xf32>
    %cst_22 = arith.constant dense<0.000000e+00> : vector<8x128xf32>
    %57 = tpu.matmul %29, %56, %cst_22 {dimension_numbers = #tpu.dot_dimension_numbers<[1], [0], [0], [1], [0, 0, 1, 1], [], []>} : vector<8x128xf32>, vector<128x128xf32>, vector<8x128xf32> -> vector<8x128xf32>
    %58 = arith.addf %55, %57 : vector<8x128xf32>
    %c769 = arith.constant 769 : index
    %c0_23 = arith.constant 0 : index
    %59 = vector.load %arg2[%c769, %c0_23] : memref<776x128xf32, #tpu.memory_space<vmem>>, vector<1x128xf32>
    %60 = vector.broadcast %59 : vector<1x128xf32> to vector<8x128xf32>
    %61 = arith.addf %58, %60 : vector<8x128xf32>
    %cst_24 = arith.constant 0.000000e+00 : f32
    %62 = vector.broadcast %cst_24 : f32 to vector<8x128xf32>
    %63 = arith.cmpf ogt, %61, %62 : vector<8x128xf32>
    %cst_25 = arith.constant 0.00999999977 : f32
    %64 = vector.broadcast %cst_25 : f32 to vector<8x128xf32>
    %65 = arith.mulf %64, %61 : vector<8x128xf32>
    %66 = arith.select %63, %61, %65 : vector<8x128xi1>, vector<8x128xf32>
    %c512 = arith.constant 512 : index
    %c0_26 = arith.constant 0 : index
    %67 = vector.load %arg2[%c512, %c0_26] : memref<776x128xf32, #tpu.memory_space<vmem>>, vector<128x128xf32>
    %cst_27 = arith.constant dense<0.000000e+00> : vector<8x128xf32>
    %68 = tpu.matmul %66, %67, %cst_27 {dimension_numbers = #tpu.dot_dimension_numbers<[1], [0], [0], [1], [0, 0, 1, 1], [], []>} : vector<8x128xf32>, vector<128x128xf32>, vector<8x128xf32> -> vector<8x128xf32>
    %c770 = arith.constant 770 : index
    %c0_28 = arith.constant 0 : index
    %69 = vector.load %arg2[%c770, %c0_28] : memref<776x128xf32, #tpu.memory_space<vmem>>, vector<1x128xf32>
    %70 = vector.broadcast %69 : vector<1x128xf32> to vector<8x128xf32>
    %71 = arith.addf %68, %70 : vector<8x128xf32>
    %cst_29 = arith.constant 0.000000e+00 : f32
    %72 = vector.broadcast %cst_29 : f32 to vector<8x128xf32>
    %73 = arith.cmpf ogt, %71, %72 : vector<8x128xf32>
    %cst_30 = arith.constant 0.00999999977 : f32
    %74 = vector.broadcast %cst_30 : f32 to vector<8x128xf32>
    %75 = arith.mulf %74, %71 : vector<8x128xf32>
    %76 = arith.select %73, %71, %75 : vector<8x128xi1>, vector<8x128xf32>
    %c640 = arith.constant 640 : index
    %c0_31 = arith.constant 0 : index
    %77 = vector.load %arg2[%c640, %c0_31] : memref<776x128xf32, #tpu.memory_space<vmem>>, vector<128x128xf32>
    %cst_32 = arith.constant dense<0.000000e+00> : vector<8x128xf32>
    %78 = tpu.matmul %76, %77, %cst_32 {dimension_numbers = #tpu.dot_dimension_numbers<[1], [0], [0], [1], [0, 0, 1, 1], [], []>} : vector<8x128xf32>, vector<128x128xf32>, vector<8x128xf32> -> vector<8x128xf32>
    %c771 = arith.constant 771 : index
    %c0_33 = arith.constant 0 : index
    %79 = vector.load %arg2[%c771, %c0_33] : memref<776x128xf32, #tpu.memory_space<vmem>>, vector<1x128xf32>
    %80 = vector.broadcast %79 : vector<1x128xf32> to vector<8x128xf32>
    %81 = arith.addf %78, %80 : vector<8x128xf32>
    %cst_34 = arith.constant 0.000000e+00 : f32
    %82 = vector.broadcast %cst_34 : f32 to vector<8x128xf32>
    %83 = arith.cmpf ogt, %81, %82 : vector<8x128xf32>
    %cst_35 = arith.constant 0.00999999977 : f32
    %84 = vector.broadcast %cst_35 : f32 to vector<8x128xf32>
    %85 = arith.mulf %84, %81 : vector<8x128xf32>
    %86 = arith.select %83, %81, %85 : vector<8x128xi1>, vector<8x128xf32>
    %c5_i32 = arith.constant 5 : i32
    %87 = vector.broadcast %c5_i32 : i32 to vector<8x128xi32>
    %88 = arith.cmpi slt, %30, %87 : vector<8x128xi32>
    %cst_36 = arith.constant -1.000000e+30 : f32
    %89 = vector.broadcast %cst_36 : f32 to vector<8x128xf32>
    %90 = arith.select %88, %86, %89 : vector<8x128xi1>, vector<8x128xf32>
    %cst_37 = arith.constant dense<0xFF800000> : vector<8xf32>
    %91 = vector.multi_reduction <maximumf>, %90, %cst_37 [1] : vector<8x128xf32> to vector<8xf32>
    %92 = vector.shape_cast %91 : vector<8xf32> to vector<8x1xf32>
    %93 = vector.broadcast %92 : vector<8x1xf32> to vector<8x128xf32>
    %94 = arith.subf %90, %93 : vector<8x128xf32>
    %95 = math.exp %94 : vector<8x128xf32>
    %cst_38 = arith.constant dense<0.000000e+00> : vector<8xf32>
    %96 = vector.multi_reduction <add>, %95, %cst_38 [1] : vector<8x128xf32> to vector<8xf32>
    %97 = vector.shape_cast %96 : vector<8xf32> to vector<8x1xf32>
    %98 = math.log %97 : vector<8x1xf32>
    %99 = arith.addf %98, %92 : vector<8x1xf32>
    %100 = vector.broadcast %99 : vector<8x1xf32> to vector<8x128xf32>
    %101 = arith.subf %86, %100 : vector<8x128xf32>
    %c0_39 = arith.constant 0 : index
    %c0_40 = arith.constant 0 : index
    %102 = vector.load %arg3[%c0_39, %c0_40] : memref<8x128xf32, #tpu.memory_space<vmem>>, vector<8x128xf32>
    tpu.vector_store %arg3[%c0_39, %c0_40], %101 {strides = array<i32>} : memref<8x128xf32, #tpu.memory_space<vmem>>, vector<8x128xf32>,
    return
  }
}

</mosaic_0001>

<llo_original>
// kernel: cage_forward_pallas.1
$region0: #{cage_forward_pallas.1}
  #allocation0 [shape = 'u32[]', space=smem, size = 0x4, offset = 0x4, fixed_abs, tag = 'smem constant byte address 0x4 - core index']
  #allocation1 [shape = 'u32[144,128]{1,0:T(1,128)}', space=vmem, size = 0x12000, scoped, tag = 'internal scratch']
  %s0 = inlined_call_operand.vmem [shape: s32[2,32,1], index: 0, kind: input, shape index: {}]
  %s1 = inlined_call_operand.vmem [shape: s32[3,8,1], index: 1, kind: input, shape index: {}]
  %s2 = inlined_call_operand.vmem [shape: f32[776,128], index: 2, kind: input, shape index: {}]
  %s3 = inlined_call_operand.vmem [shape: f32[8,128], index: 3, kind: output, shape index: {}]
  %s4 = sld [smem:[#allocation0]]
  $region22: #{cage_forward_pallas.1} parent=0
    _
  %s6 = ssub.s32 1, %s4
  %s7 = scalar_select 0, %s6, %s4
  // Predicated region
  $region2: #{cage_forward_pallas.1} parent=0 // pred_check
    _
  $region3: #{cage_forward_pallas.1} parent=0 // pred_check_branch
    %9 = sbr.rel (0) target = $region5
  $region4: #{cage_forward_pallas.1} parent=0 // pred_region
    _
  $region5: #{cage_forward_pallas.1} parent=0 // pred_fallthru
    _
  // Predicated region
  $region6: #{cage_forward_pallas.1} parent=0 // pred_check
    _
  $region7: #{cage_forward_pallas.1} parent=0 // pred_check_branch
    %11 = sbr.rel (0) target = $region9
  $region8: #{cage_forward_pallas.1} parent=0 // pred_region
    _
  $region9: #{cage_forward_pallas.1} parent=0 // pred_fallthru
    _
  // Predicated region
  $region10: #{cage_forward_pallas.1} parent=0 // pred_check
    _
  $region11: #{cage_forward_pallas.1} parent=0 // pred_check_branch
    %13 = sbr.rel (0) target = $region13
  $region12: #{cage_forward_pallas.1} parent=0 // pred_region
    _
  $region13: #{cage_forward_pallas.1} parent=0 // pred_fallthru
    _
  %v14 = vlaneseq
  %v15 = vand.u32 %v14, 127
  %v16 = vld [vmem:[%s0] sm:$0xff]
  %v17 = vld [vmem:[%s0 + $0x8] sm:$0xff]
  %v18 = vld [vmem:[%s0 + $0x10] sm:$0xff]
  %v19 = vld [vmem:[%s0 + $0x18] sm:$0xff]
  %20 = vset.pattern.permute.xlu0 0
  %21 = vperm.xlu0 %20, %v16
  %v22 = vpop.permute.xlu0 %21
  %23 = vset.pattern.permute.xlu0 0
  %24 = vperm.xlu0 %23, %v17
  %v25 = vpop.permute.xlu0 %24
  %26 = vset.pattern.permute.xlu0 0
  %27 = vperm.xlu0 %26, %v18
  %v28 = vpop.permute.xlu0 %27
  %29 = vset.pattern.permute.xlu0 0
  %30 = vperm.xlu0 %29, %v19
  %v31 = vpop.permute.xlu0 %30
  %vm32 = vcmp.eq.s32.totalorder %v15, %v22
  %vm33 = vcmp.eq.s32.totalorder %v15, %v25
  %vm34 = vcmp.eq.s32.totalorder %v15, %v28
  %vm35 = vcmp.eq.s32.totalorder %v15, %v31
  %v36 = vsel %vm32, 1, 0
  %v37 = vsel %vm33, 1, 0
  %v38 = vsel %vm34, 1, 0
  %v39 = vsel %vm35, 1, 0
  %v40 = vcvt.s32.f32 %v36
  %v41 = vcvt.s32.f32 %v37
  %v42 = vcvt.s32.f32 %v38
  %v43 = vcvt.s32.f32 %v39
  %s44 = scalar_lea.vmem %s0, 32
  %v45 = vld [vmem:[%s44] sm:$0xff]
  %v46 = vld [vmem:[%s44 + $0x8] sm:$0xff]
  %v47 = vld [vmem:[%s44 + $0x10] sm:$0xff]
  %v48 = vld [vmem:[%s44 + $0x18] sm:$0xff]
  %49 = vset.pattern.permute.xlu0 0
  %50 = vperm.xlu0 %49, %v45
  %v51 = vpop.permute.xlu0 %50
  %52 = vset.pattern.permute.xlu0 0
  %53 = vperm.xlu0 %52, %v46
  %v54 = vpop.permute.xlu0 %53
  %55 = vset.pattern.permute.xlu0 0
  %56 = vperm.xlu0 %55, %v47
  %v57 = vpop.permute.xlu0 %56
  %58 = vset.pattern.permute.xlu0 0
  %59 = vperm.xlu0 %58, %v48
  %v60 = vpop.permute.xlu0 %59
  %vm61 = vcmp.eq.s32.totalorder %v15, %v51
  %vm62 = vcmp.eq.s32.totalorder %v15, %v54
  %vm63 = vcmp.eq.s32.totalorder %v15, %v57
  %vm64 = vcmp.eq.s32.totalorder %v15, %v60
  %v65 = vsel %vm61, 1, 0
  %v66 = vsel %vm62, 1, 0
  %v67 = vsel %vm63, 1, 0
  %v68 = vsel %vm64, 1, 0
  %v69 = vcvt.s32.f32 %v65
  %v70 = vcvt.s32.f32 %v66
  %v71 = vcvt.s32.f32 %v67
  %v72 = vcvt.s32.f32 %v68
  %v73 = vadd.f32 %v40, %v69
  %v74 = vadd.f32 %v41, %v70
  %v75 = vadd.f32 %v42, %v71
  %v76 = vadd.f32 %v43, %v72
  %v77 = vld [vmem:[%s2] sm:$0xff]
  %v78 = vld [vmem:[%s2 + $0x8] sm:$0xff]
  %v79 = vld [vmem:[%s2 + $0x10] sm:$0xff]
  %v80 = vld [vmem:[%s2 + $0x18] sm:$0xff]
  %v81 = vld [vmem:[%s2 + $0x20] sm:$0xff]
  %v82 = vld [vmem:[%s2 + $0x28] sm:$0xff]
  %v83 = vld [vmem:[%s2 + $0x30] sm:$0xff]
  %v84 = vld [vmem:[%s2 + $0x38] sm:$0xff]
  %v85 = vld [vmem:[%s2 + $0x40] sm:$0xff]
  %v86 = vld [vmem:[%s2 + $0x48] sm:$0xff]
  %v87 = vld [vmem:[%s2 + $0x50] sm:$0xff]
  %v88 = vld [vmem:[%s2 + $0x58] sm:$0xff]
  %v89 = vld [vmem:[%s2 + $0x60] sm:$0xff]
  %v90 = vld [vmem:[%s2 + $0x68] sm:$0xff]
  %v91 = vld [vmem:[%s2 + $0x70] sm:$0xff]
  %v92 = vld [vmem:[%s2 + $0x78] sm:$0xff]
  %v93 = vld [vmem:[%s2 + $0x300] sm:$0x1]
  %v94 = vlaneseq
  %v95 = vshrl.u32 %v94, 7
  %v96 = vsub.s32 0, %v95
  %v97 = vrot.slane %v93, %v96
  %98 = vmatprep.subr.mxu0 0.0
  %99 = vmatpush1.msra.mxu0 %v77
  %100 = vmatprep.subr.mxu0 0.0
  %101 = vmatpush1.msra.mxu0 %v78
  %102 = vmatprep.subr.mxu0 0.0
  %103 = vmatpush1.msra.mxu0 %v79
  %104 = vmatprep.subr.mxu0 0.0
  %105 = vmatpush1.msra.mxu0 %v80
  %106 = vmatprep.subr.mxu0 0.0
  %107 = vmatpush1.msra.mxu0 %v81
  %108 = vmatprep.subr.mxu0 0.0
  %109 = vmatpush1.msra.mxu0 %v82
  %110 = vmatprep.subr.mxu0 0.0
  %111 = vmatpush1.msra.mxu0 %v83
  %112 = vmatprep.subr.mxu0 0.0
  %113 = vmatpush1.msra.mxu0 %v84
  %114 = vmatprep.subr.mxu0 0.0
  %115 = vmatpush1.msra.mxu0 %v85
  %116 = vmatprep.subr.mxu0 0.0
  %117 = vmatpush1.msra.mxu0 %v86
  %118 = vmatprep.subr.mxu0 0.0
  %119 = vmatpush1.msra.mxu0 %v87
  %120 = vmatprep.subr.mxu0 0.0
  %121 = vmatpush1.msra.mxu0 %v88
  %122 = vmatprep.subr.mxu0 0.0
  %123 = vmatpush1.msra.mxu0 %v89
  %124 = vmatprep.subr.mxu0 0.0
  %125 = vmatpush1.msra.mxu0 %v90
  %126 = vmatprep.subr.mxu0 0.0
  %127 = vmatpush1.msra.mxu0 %v91
  %128 = vmatprep.subr.mxu0 0.0
  %129 = vmatpush1.msra.mxu0 %v92
  %130 = vmatprep.subr.mxu0 0.0
  %131 = vmatpush1.msra.mxu0 0.0
  %132 = vmatprep.subr.mxu0 0.0
  %133 = vmatpush1.msra.mxu0 0.0
  %134 = vmatprep.subr.mxu0 0.0
  %135 = vmatpush1.msra.mxu0 0.0
  %136 = vmatprep.subr.mxu0 0.0
  %137 = vmatpush1.msra.mxu0 0.0
  %138 = vmatprep.subr.mxu0 0.0
  %139 = vmatpush1.msra.mxu0 0.0
  %140 = vmatprep.subr.mxu0 0.0
  %141 = vmatpush1.msra.mxu0 0.0
  %142 = vmatprep.subr.mxu0 0.0
  %143 = vmatpush1.msra.mxu0 0.0
  %144 = vmatprep.subr.mxu0 0.0
  %145 = vmatpush1.msra.mxu0 0.0
  %146 = vmatprep.subr.mxu0 0.0
  %147 = vmatpush1.msra.mxu0 0.0
  %148 = vmatprep.subr.mxu0 0.0
  %149 = vmatpush1.msra.mxu0 0.0
  %150 = vmatprep.subr.mxu0 0.0
  %151 = vmatpush1.msra.mxu0 0.0
  %152 = vmatprep.subr.mxu0 0.0
  %153 = vmatpush1.msra.mxu0 0.0
  %154 = vmatprep.subr.mxu0 0.0
  %155 = vmatpush1.msra.mxu0 0.0
  %156 = vmatprep.subr.mxu0 0.0
  %157 = vmatpush1.msra.mxu0 0.0
  %158 = vmatprep.subr.mxu0 0.0
  %159 = vmatpush1.msra.mxu0 0.0
  %160 = vmatprep.subr.mxu0 0.0
  %161 = vmatpush1.msra.mxu0 0.0
  %162 = vmatprep.mubr.f32.mxu0 0.0
  %163 = vmatmul.mubr.f32.gmra.mrb[0].mxu0 %v73
  %v164 = vpop.f32.mrb[0].mxu0
  %v165 = vadd.f32 %v97, %v164
  %v166 = vpop.f32.mrb[0].mxu0
  %167 = vmatprep.mubr.f32.mxu0 0.0
  %168 = vmatmul.mubr.f32.gmra.mrb[0].mxu0 %v74
  %v169 = vpop.f32.mrb[0].mxu0
  %v170 = vadd.f32 %v97, %v169
  %v171 = vpop.f32.mrb[0].mxu0
  %172 = vmatprep.mubr.f32.mxu0 0.0
  %173 = vmatmul.mubr.f32.gmra.mrb[0].mxu0 %v75
  %v174 = vpop.f32.mrb[0].mxu0
  %v175 = vadd.f32 %v97, %v174
  %v176 = vpop.f32.mrb[0].mxu0
  %177 = vmatprep.mubr.f32.mxu0 0.0
  %178 = vmatmul.mubr.f32.gmra.mrb[0].mxu0 %v76
  %v179 = vpop.f32.mrb[0].mxu0
  %v180 = vadd.f32 %v97, %v179
  %v181 = vpop.f32.mrb[0].mxu0
  %182 = vdwg.mxu0
  %vm183 = vcmp.gt.f32.partialorder %v165, 0.0
  %vm184 = vcmp.gt.f32.partialorder %v170, 0.0
  %vm185 = vcmp.gt.f32.partialorder %v175, 0.0
  %vm186 = vcmp.gt.f32.partialorder %v180, 0.0
  %v187 = vmul.f32 %v165, 0.01
  %v188 = vmul.f32 %v170, 0.01
  %v189 = vmul.f32 %v175, 0.01
  %v190 = vmul.f32 %v180, 0.01
  %v191 = vsel %vm183, %v165, %v187
  %v192 = vsel %vm184, %v170, %v188
  %v193 = vsel %vm185, %v175, %v189
  %v194 = vsel %vm186, %v180, %v190
  %v195 = vmax.f32 %v191, %v192
  %v196 = vmax.f32 %v195, %v193
  %v197 = vld [vmem:[%s1] sm:$0xff]
  %198 = vset.pattern.permute.xlu0 0
  %199 = vperm.xlu0 %198, %v197
  %v200 = vpop.permute.xlu0 %199
  %vm201 = vcmp.eq.s32.totalorder %v15, %v200
  %v202 = vsel %vm201, 1, 0
  %v203 = vcvt.s32.f32 %v202
  %s204 = scalar_lea.vmem %s1, 8
  %v205 = vld [vmem:[%s204] sm:$0xff]
  %206 = vset.pattern.permute.xlu0 0
  %207 = vperm.xlu0 %206, %v205
  %v208 = vpop.permute.xlu0 %207
  %vm209 = vcmp.eq.s32.totalorder %v15, %v208
  %v210 = vsel %vm209, 1, 0
  %v211 = vcvt.s32.f32 %v210
  %v212 = vadd.f32 %v203, %v211
  %s213 = scalar_lea.vmem %s1, 16
  %v214 = vld [vmem:[%s213] sm:$0xff]
  %215 = vset.pattern.permute.xlu0 0
  %216 = vperm.xlu0 %215, %v214
  %v217 = vpop.permute.xlu0 %216
  %vm218 = vcmp.eq.s32.totalorder %v15, %v217
  %v219 = vsel %vm218, 1, 0
  %v220 = vcvt.s32.f32 %v219
  %v221 = vadd.f32 %v212, %v220
  %v222 = vld [vmem:[%s2 + $0x80] sm:$0xff]
  %v223 = vld [vmem:[%s2 + $0x88] sm:$0xff]
  %v224 = vld [vmem:[%s2 + $0x90] sm:$0xff]
  %v225 = vld [vmem:[%s2 + $0x98] sm:$0xff]
  %v226 = vld [vmem:[%s2 + $0xa0] sm:$0xff]
  %v227 = vld [vmem:[%s2 + $0xa8] sm:$0xff]
  %v228 = vld [vmem:[%s2 + $0xb0] sm:$0xff]
  %v229 = vld [vmem:[%s2 + $0xb8] sm:$0xff]
  %v230 = vld [vmem:[%s2 + $0xc0] sm:$0xff]
  %v231 = vld [vmem:[%s2 + $0xc8] sm:$0xff]
  %v232 = vld [vmem:[%s2 + $0xd0] sm:$0xff]
  %v233 = vld [vmem:[%s2 + $0xd8] sm:$0xff]
  %v234 = vld [vmem:[%s2 + $0xe0] sm:$0xff]
  %v235 = vld [vmem:[%s2 + $0xe8] sm:$0xff]
  %v236 = vld [vmem:[%s2 + $0xf0] sm:$0xff]
  %v237 = vld [vmem:[%s2 + $0xf8] sm:$0xff]
  %v238 = vld [vmem:[%s2 + $0x100] sm:$0xff]
  %v239 = vld [vmem:[%s2 + $0x108] sm:$0xff]
  %v240 = vld [vmem:[%s2 + $0x110] sm:$0xff]
  %v241 = vld [vmem:[%s2 + $0x118] sm:$0xff]
  %v242 = vld [vmem:[%s2 + $0x120] sm:$0xff]
  %v243 = vld [vmem:[%s2 + $0x128] sm:$0xff]
  %v244 = vld [vmem:[%s2 + $0x130] sm:$0xff]
  %v245 = vld [vmem:[%s2 + $0x138] sm:$0xff]
  %v246 = vld [vmem:[%s2 + $0x140] sm:$0xff]
  %v247 = vld [vmem:[%s2 + $0x148] sm:$0xff]
  %v248 = vld [vmem:[%s2 + $0x150] sm:$0xff]
  %v249 = vld [vmem:[%s2 + $0x158] sm:$0xff]
  %v250 = vld [vmem:[%s2 + $0x160] sm:$0xff]
  %v251 = vld [vmem:[%s2 + $0x168] sm:$0xff]
  %v252 = vld [vmem:[%s2 + $0x170] sm:$0xff]
  %v253 = vld [vmem:[%s2 + $0x178] sm:$0xff]
  %254 = vmatprep.subr.mxu0 0.0
  %255 = vmatpush1.msra.mxu0 %v238
  %256 = vmatprep.subr.mxu0 0.0
  %257 = vmatpush1.msra.mxu0 %v239
  %258 = vmatprep.subr.mxu0 0.0
  %259 = vmatpush1.msra.mxu0 %v240
  %260 = vmatprep.subr.mxu0 0.0
  %261 = vmatpush1.msra.mxu0 %v241
  %262 = vmatprep.subr.mxu0 0.0
  %263 = vmatpush1.msra.mxu0 %v242
  %264 = vmatprep.subr.mxu0 0.0
  %265 = vmatpush1.msra.mxu0 %v243
  %266 = vmatprep.subr.mxu0 0.0
  %267 = vmatpush1.msra.mxu0 %v244
  %268 = vmatprep.subr.mxu0 0.0
  %269 = vmatpush1.msra.mxu0 %v245
  %270 = vmatprep.subr.mxu0 0.0
  %271 = vmatpush1.msra.mxu0 %v246
  %272 = vmatprep.subr.mxu0 0.0
  %273 = vmatpush1.msra.mxu0 %v247
  %274 = vmatprep.subr.mxu0 0.0
  %275 = vmatpush1.msra.mxu0 %v248
  %276 = vmatprep.subr.mxu0 0.0
  %277 = vmatpush1.msra.mxu0 %v249
  %278 = vmatprep.subr.mxu0 0.0
  %279 = vmatpush1.msra.mxu0 %v250
  %280 = vmatprep.subr.mxu0 0.0
  %281 = vmatpush1.msra.mxu0 %v251
  %282 = vmatprep.subr.mxu0 0.0
  %283 = vmatpush1.msra.mxu0 %v252
  %284 = vmatprep.subr.mxu0 0.0
  %285 = vmatpush1.msra.mxu0 %v253
  %286 = vmatprep.subr.mxu0 0.0
  %287 = vmatpush1.msra.mxu0 0.0
  %288 = vmatprep.subr.mxu0 0.0
  %289 = vmatpush1.msra.mxu0 0.0
  %290 = vmatprep.subr.mxu0 0.0
  %291 = vmatpush1.msra.mxu0 0.0
  %292 = vmatprep.subr.mxu0 0.0
  %293 = vmatpush1.msra.mxu0 0.0
  %294 = vmatprep.subr.mxu0 0.0
  %295 = vmatpush1.msra.mxu0 0.0
  %296 = vmatprep.subr.mxu0 0.0
  %297 = vmatpush1.msra.mxu0 0.0
  %298 = vmatprep.subr.mxu0 0.0
  %299 = vmatpush1.msra.mxu0 0.0
  %300 = vmatprep.subr.mxu0 0.0
  %301 = vmatpush1.msra.mxu0 0.0
  %302 = vmatprep.subr.mxu0 0.0
  %303 = vmatpush1.msra.mxu0 0.0
  %304 = vmatprep.subr.mxu0 0.0
  %305 = vmatpush1.msra.mxu0 0.0
  %306 = vmatprep.subr.mxu0 0.0
  %307 = vmatpush1.msra.mxu0 0.0
  %308 = vmatprep.subr.mxu0 0.0
  %309 = vmatpush1.msra.mxu0 0.0
  %310 = vmatprep.subr.mxu0 0.0
  %311 = vmatpush1.msra.mxu0 0.0
  %312 = vmatprep.subr.mxu0 0.0
  %313 = vmatpush1.msra.mxu0 0.0
  %314 = vmatprep.subr.mxu0 0.0
  %315 = vmatpush1.msra.mxu0 0.0
  %316 = vmatprep.subr.mxu0 0.0
  %317 = vmatpush1.msra.mxu0 0.0
  %318 = vmatprep.mubr.f32.mxu0 0.0
  %319 = vmatmul.mubr.f32.gmra.mrb[0].mxu0 %v196
  %v320 = vpop.f32.mrb[0].mxu0
  %v321 = vadd.f32 0.0, %v320
  %v322 = vpop.f32.mrb[0].mxu0
  %323 = vdwg.mxu0
  %324 = vmatprep.subr.mxu0 0.0
  %325 = vmatpush1.msra.mxu0 %v222
  %326 = vmatprep.subr.mxu0 0.0
  %327 = vmatpush1.msra.mxu0 %v223
  %328 = vmatprep.subr.mxu0 0.0
  %329 = vmatpush1.msra.mxu0 %v224
  %330 = vmatprep.subr.mxu0 0.0
  %331 = vmatpush1.msra.mxu0 %v225
  %332 = vmatprep.subr.mxu0 0.0
  %333 = vmatpush1.msra.mxu0 %v226
  %334 = vmatprep.subr.mxu0 0.0
  %335 = vmatpush1.msra.mxu0 %v227
  %336 = vmatprep.subr.mxu0 0.0
  %337 = vmatpush1.msra.mxu0 %v228
  %338 = vmatprep.subr.mxu0 0.0
  %339 = vmatpush1.msra.mxu0 %v229
  %340 = vmatprep.subr.mxu0 0.0
  %341 = vmatpush1.msra.mxu0 %v230
  %342 = vmatprep.subr.mxu0 0.0
  %343 = vmatpush1.msra.mxu0 %v231
  %344 = vmatprep.subr.mxu0 0.0
  %345 = vmatpush1.msra.mxu0 %v232
  %346 = vmatprep.subr.mxu0 0.0
  %347 = vmatpush1.msra.mxu0 %v233
  %348 = vmatprep.subr.mxu0 0.0
  %349 = vmatpush1.msra.mxu0 %v234
  %350 = vmatprep.subr.mxu0 0.0
  %351 = vmatpush1.msra.mxu0 %v235
  %352 = vmatprep.subr.mxu0 0.0
  %353 = vmatpush1.msra.mxu0 %v236
  %354 = vmatprep.subr.mxu0 0.0
  %355 = vmatpush1.msra.mxu0 %v237
  %356 = vmatprep.subr.mxu0 0.0
  %357 = vmatpush1.msra.mxu0 0.0
  %358 = vmatprep.subr.mxu0 0.0
  %359 = vmatpush1.msra.mxu0 0.0
  %360 = vmatprep.subr.mxu0 0.0
  %361 = vmatpush1.msra.mxu0 0.0
  %362 = vmatprep.subr.mxu0 0.0
  %363 = vmatpush1.msra.mxu0 0.0
  %364 = vmatprep.subr.mxu0 0.0
  %365 = vmatpush1.msra.mxu0 0.0
  %366 = vmatprep.subr.mxu0 0.0
  %367 = vmatpush1.msra.mxu0 0.0
  %368 = vmatprep.subr.mxu0 0.0
  %369 = vmatpush1.msra.mxu0 0.0
  %370 = vmatprep.subr.mxu0 0.0
  %371 = vmatpush1.msra.mxu0 0.0
  %372 = vmatprep.subr.mxu0 0.0
  %373 = vmatpush1.msra.mxu0 0.0
  %374 = vmatprep.subr.mxu0 0.0
  %375 = vmatpush1.msra.mxu0 0.0
  %376 = vmatprep.subr.mxu0 0.0
  %377 = vmatpush1.msra.mxu0 0.0
  %378 = vmatprep.subr.mxu0 0.0
  %379 = vmatpush1.msra.mxu0 0.0
  %380 = vmatprep.subr.mxu0 0.0
  %381 = vmatpush1.msra.mxu0 0.0
  %382 = vmatprep.subr.mxu0 0.0
  %383 = vmatpush1.msra.mxu0 0.0
  %384 = vmatprep.subr.mxu0 0.0
  %385 = vmatpush1.msra.mxu0 0.0
  %386 = vmatprep.subr.mxu0 0.0
  %387 = vmatpush1.msra.mxu0 0.0
  %388 = vmatprep.mubr.f32.mxu0 0.0
  %389 = vmatmul.mubr.f32.gmra.mrb[0].mxu0 %v221
  %v390 = vpop.f32.mrb[0].mxu0
  %v391 = vadd.f32 %v321, %v390
  %v392 = vpop.f32.mrb[0].mxu0
  %393 = vdwg.mxu0
  %v394 = vld [vmem:[%s2 + $0x180] sm:$0xff]
  %v395 = vld [vmem:[%s2 + $0x188] sm:$0xff]
  %v396 = vld [vmem:[%s2 + $0x190] sm:$0xff]
  %v397 = vld [vmem:[%s2 + $0x198] sm:$0xff]
  %v398 = vld [vmem:[%s2 + $0x1a0] sm:$0xff]
  %v399 = vld [vmem:[%s2 + $0x1a8] sm:$0xff]
  %v400 = vld [vmem:[%s2 + $0x1b0] sm:$0xff]
  %v401 = vld [vmem:[%s2 + $0x1b8] sm:$0xff]
  %v402 = vld [vmem:[%s2 + $0x1c0] sm:$0xff]
  %v403 = vld [vmem:[%s2 + $0x1c8] sm:$0xff]
  %v404 = vld [vmem:[%s2 + $0x1d0] sm:$0xff]
  %v405 = vld [vmem:[%s2 + $0x1d8] sm:$0xff]
  %v406 = vld [vmem:[%s2 + $0x1e0] sm:$0xff]
  %v407 = vld [vmem:[%s2 + $0x1e8] sm:$0xff]
  %v408 = vld [vmem:[%s2 + $0x1f0] sm:$0xff]
  %v409 = vld [vmem:[%s2 + $0x1f8] sm:$0xff]
  %410 = vmatprep.subr.mxu0 0.0
  %411 = vmatpush1.msra.mxu0 %v394
  %412 = vmatprep.subr.mxu0 0.0
  %413 = vmatpush1.msra.mxu0 %v395
  %414 = vmatprep.subr.mxu0 0.0
  %415 = vmatpush1.msra.mxu0 %v396
  %416 = vmatprep.subr.mxu0 0.0
  %417 = vmatpush1.msra.mxu0 %v397
  %418 = vmatprep.subr.mxu0 0.0
  %419 = vmatpush1.msra.mxu0 %v398
  %420 = vmatprep.subr.mxu0 0.0
  %421 = vmatpush1.msra.mxu0 %v399
  %422 = vmatprep.subr.mxu0 0.0
  %423 = vmatpush1.msra.mxu0 %v400
  %424 = vmatprep.subr.mxu0 0.0
  %425 = vmatpush1.msra.mxu0 %v401
  %426 = vmatprep.subr.mxu0 0.0
  %427 = vmatpush1.msra.mxu0 %v402
  %428 = vmatprep.subr.mxu0 0.0
  %429 = vmatpush1.msra.mxu0 %v403
  %430 = vmatprep.subr.mxu0 0.0
  %431 = vmatpush1.msra.mxu0 %v404
  %432 = vmatprep.subr.mxu0 0.0
  %433 = vmatpush1.msra.mxu0 %v405
  %434 = vmatprep.subr.mxu0 0.0
  %435 = vmatpush1.msra.mxu0 %v406
  %436 = vmatprep.subr.mxu0 0.0
  %437 = vmatpush1.msra.mxu0 %v407
  %438 = vmatprep.subr.mxu0 0.0
  %439 = vmatpush1.msra.mxu0 %v408
  %440 = vmatprep.subr.mxu0 0.0
  %441 = vmatpush1.msra.mxu0 %v409
  %442 = vmatprep.subr.mxu0 0.0
  %443 = vmatpush1.msra.mxu0 0.0
  %444 = vmatprep.subr.mxu0 0.0
  %445 = vmatpush1.msra.mxu0 0.0
  %446 = vmatprep.subr.mxu0 0.0
  %447 = vmatpush1.msra.mxu0 0.0
  %448 = vmatprep.subr.mxu0 0.0
  %449 = vmatpush1.msra.mxu0 0.0
  %450 = vmatprep.subr.mxu0 0.0
  %451 = vmatpush1.msra.mxu0 0.0
  %452 = vmatprep.subr.mxu0 0.0
  %453 = vmatpush1.msra.mxu0 0.0
  %454 = vmatprep.subr.mxu0 0.0
  %455 = vmatpush1.msra.mxu0 0.0
  %456 = vmatprep.subr.mxu0 0.0
  %457 = vmatpush1.msra.mxu0 0.0
  %458 = vmatprep.subr.mxu0 0.0
  %459 = vmatpush1.msra.mxu0 0.0
  %460 = vmatprep.subr.mxu0 0.0
  %461 = vmatpush1.msra.mxu0 0.0
  %462 = vmatprep.subr.mxu0 0.0
  %463 = vmatpush1.msra.mxu0 0.0
  %464 = vmatprep.subr.mxu0 0.0
  %465 = vmatpush1.msra.mxu0 0.0
  %466 = vmatprep.subr.mxu0 0.0
  %467 = vmatpush1.msra.mxu0 0.0
  %468 = vmatprep.subr.mxu0 0.0
  %469 = vmatpush1.msra.mxu0 0.0
  %470 = vmatprep.subr.mxu0 0.0
  %471 = vmatpush1.msra.mxu0 0.0
  %472 = vmatprep.subr.mxu0 0.0
  %473 = vmatpush1.msra.mxu0 0.0
  %474 = vmatprep.mubr.f32.mxu0 0.0
  %475 = vmatmul.mubr.f32.gmra.mrb[0].mxu0 %v194
  %v476 = vpop.f32.mrb[0].mxu0
  %v477 = vadd.f32 0.0, %v476
  %v478 = vpop.f32.mrb[0].mxu0
  %479 = vdwg.mxu0
  %v480 = vadd.f32 %v391, %v477
  %v481 = vld [vmem:[%s2 + $0x301] sm:$0x1]
  %v482 = vlaneseq
  %v483 = vshrl.u32 %v482, 7
  %v484 = vsub.s32 0, %v483
  %v485 = vrot.slane %v481, %v484
  %v486 = vadd.f32 %v480, %v485
  %vm487 = vcmp.gt.f32.partialorder %v486, 0.0
  %v488 = vmul.f32 %v486, 0.01
  %v489 = vsel %vm487, %v486, %v488
  %v490 = vld [vmem:[%s2 + $0x200] sm:$0xff]
  %v491 = vld [vmem:[%s2 + $0x208] sm:$0xff]
  %v492 = vld [vmem:[%s2 + $0x210] sm:$0xff]
  %v493 = vld [vmem:[%s2 + $0x218] sm:$0xff]
  %v494 = vld [vmem:[%s2 + $0x220] sm:$0xff]
  %v495 = vld [vmem:[%s2 + $0x228] sm:$0xff]
  %v496 = vld [vmem:[%s2 + $0x230] sm:$0xff]
  %v497 = vld [vmem:[%s2 + $0x238] sm:$0xff]
  %v498 = vld [vmem:[%s2 + $0x240] sm:$0xff]
  %v499 = vld [vmem:[%s2 + $0x248] sm:$0xff]
  %v500 = vld [vmem:[%s2 + $0x250] sm:$0xff]
  %v501 = vld [vmem:[%s2 + $0x258] sm:$0xff]
  %v502 = vld [vmem:[%s2 + $0x260] sm:$0xff]
  %v503 = vld [vmem:[%s2 + $0x268] sm:$0xff]
  %v504 = vld [vmem:[%s2 + $0x270] sm:$0xff]
  %v505 = vld [vmem:[%s2 + $0x278] sm:$0xff]
  %v506 = vld [vmem:[%s2 + $0x302] sm:$0x1]
  %v507 = vlaneseq
  %v508 = vshrl.u32 %v507, 7
  %v509 = vsub.s32 0, %v508
  %v510 = vrot.slane %v506, %v509
  %511 = vmatprep.subr.mxu0 0.0
  %512 = vmatpush1.msra.mxu0 %v490
  %513 = vmatprep.subr.mxu0 0.0
  %514 = vmatpush1.msra.mxu0 %v491
  %515 = vmatprep.subr.mxu0 0.0
  %516 = vmatpush1.msra.mxu0 %v492
  %517 = vmatprep.subr.mxu0 0.0
  %518 = vmatpush1.msra.mxu0 %v493
  %519 = vmatprep.subr.mxu0 0.0
  %520 = vmatpush1.msra.mxu0 %v494
  %521 = vmatprep.subr.mxu0 0.0
  %522 = vmatpush1.msra.mxu0 %v495
  %523 = vmatprep.subr.mxu0 0.0
  %524 = vmatpush1.msra.mxu0 %v496
  %525 = vmatprep.subr.mxu0 0.0
  %526 = vmatpush1.msra.mxu0 %v497
  %527 = vmatprep.subr.mxu0 0.0
  %528 = vmatpush1.msra.mxu0 %v498
  %529 = vmatprep.subr.mxu0 0.0
  %530 = vmatpush1.msra.mxu0 %v499
  %531 = vmatprep.subr.mxu0 0.0
  %532 = vmatpush1.msra.mxu0 %v500
  %533 = vmatprep.subr.mxu0 0.0
  %534 = vmatpush1.msra.mxu0 %v501
  %535 = vmatprep.subr.mxu0 0.0
  %536 = vmatpush1.msra.mxu0 %v502
  %537 = vmatprep.subr.mxu0 0.0
  %538 = vmatpush1.msra.mxu0 %v503
  %539 = vmatprep.subr.mxu0 0.0
  %540 = vmatpush1.msra.mxu0 %v504
  %541 = vmatprep.subr.mxu0 0.0
  %542 = vmatpush1.msra.mxu0 %v505
  %543 = vmatprep.subr.mxu0 0.0
  %544 = vmatpush1.msra.mxu0 0.0
  %545 = vmatprep.subr.mxu0 0.0
  %546 = vmatpush1.msra.mxu0 0.0
  %547 = vmatprep.subr.mxu0 0.0
  %548 = vmatpush1.msra.mxu0 0.0
  %549 = vmatprep.subr.mxu0 0.0
  %550 = vmatpush1.msra.mxu0 0.0
  %551 = vmatprep.subr.mxu0 0.0
  %552 = vmatpush1.msra.mxu0 0.0
  %553 = vmatprep.subr.mxu0 0.0
  %554 = vmatpush1.msra.mxu0 0.0
  %555 = vmatprep.subr.mxu0 0.0
  %556 = vmatpush1.msra.mxu0 0.0
  %557 = vmatprep.subr.mxu0 0.0
  %558 = vmatpush1.msra.mxu0 0.0
  %559 = vmatprep.subr.mxu0 0.0
  %560 = vmatpush1.msra.mxu0 0.0
  %561 = vmatprep.subr.mxu0 0.0
  %562 = vmatpush1.msra.mxu0 0.0
  %563 = vmatprep.subr.mxu0 0.0
  %564 = vmatpush1.msra.mxu0 0.0
  %565 = vmatprep.subr.mxu0 0.0
  %566 = vmatpush1.msra.mxu0 0.0
  %567 = vmatprep.subr.mxu0 0.0
  %568 = vmatpush1.msra.mxu0 0.0
  %569 = vmatprep.subr.mxu0 0.0
  %570 = vmatpush1.msra.mxu0 0.0
  %571 = vmatprep.subr.mxu0 0.0
  %572 = vmatpush1.msra.mxu0 0.0
  %573 = vmatprep.subr.mxu0 0.0
  %574 = vmatpush1.msra.mxu0 0.0
  %575 = vmatprep.mubr.f32.mxu0 0.0
  %576 = vmatmul.mubr.f32.gmra.mrb[0].mxu0 %v489
  %v577 = vpop.f32.mrb[0].mxu0
  %v578 = vadd.f32 %v510, %v577
  %v579 = vpop.f32.mrb[0].mxu0
  %580 = vdwg.mxu0
  %vm581 = vcmp.gt.f32.partialorder %v578, 0.0
  %v582 = vmul.f32 %v578, 0.01
  %v583 = vsel %vm581, %v578, %v582
  %v584 = vld [vmem:[%s2 + $0x280] sm:$0xff]
  %v585 = vld [vmem:[%s2 + $0x288] sm:$0xff]
  %v586 = vld [vmem:[%s2 + $0x290] sm:$0xff]
  %v587 = vld [vmem:[%s2 + $0x298] sm:$0xff]
  %v588 = vld [vmem:[%s2 + $0x2a0] sm:$0xff]
  %v589 = vld [vmem:[%s2 + $0x2a8] sm:$0xff]
  %v590 = vld [vmem:[%s2 + $0x2b0] sm:$0xff]
  %v591 = vld [vmem:[%s2 + $0x2b8] sm:$0xff]
  %v592 = vld [vmem:[%s2 + $0x2c0] sm:$0xff]
  %v593 = vld [vmem:[%s2 + $0x2c8] sm:$0xff]
  %v594 = vld [vmem:[%s2 + $0x2d0] sm:$0xff]
  %v595 = vld [vmem:[%s2 + $0x2d8] sm:$0xff]
  %v596 = vld [vmem:[%s2 + $0x2e0] sm:$0xff]
  %v597 = vld [vmem:[%s2 + $0x2e8] sm:$0xff]
  %v598 = vld [vmem:[%s2 + $0x2f0] sm:$0xff]
  %v599 = vld [vmem:[%s2 + $0x2f8] sm:$0xff]
  %v600 = vld [vmem:[%s2 + $0x303] sm:$0x1]
  %v601 = vlaneseq
  %v602 = vshrl.u32 %v601, 7
  %v603 = vsub.s32 0, %v602
  %v604 = vrot.slane %v600, %v603
  %605 = vmatprep.subr.mxu0 0.0
  %606 = vmatpush1.msra.mxu0 %v584
  %607 = vmatprep.subr.mxu0 0.0
  %608 = vmatpush1.msra.mxu0 %v585
  %609 = vmatprep.subr.mxu0 0.0
  %610 = vmatpush1.msra.mxu0 %v586
  %611 = vmatprep.subr.mxu0 0.0
  %612 = vmatpush1.msra.mxu0 %v587
  %613 = vmatprep.subr.mxu0 0.0
  %614 = vmatpush1.msra.mxu0 %v588
  %615 = vmatprep.subr.mxu0 0.0
  %616 = vmatpush1.msra.mxu0 %v589
  %617 = vmatprep.subr.mxu0 0.0
  %618 = vmatpush1.msra.mxu0 %v590
  %619 = vmatprep.subr.mxu0 0.0
  %620 = vmatpush1.msra.mxu0 %v591
  %621 = vmatprep.subr.mxu0 0.0
  %622 = vmatpush1.msra.mxu0 %v592
  %623 = vmatprep.subr.mxu0 0.0
  %624 = vmatpush1.msra.mxu0 %v593
  %625 = vmatprep.subr.mxu0 0.0
  %626 = vmatpush1.msra.mxu0 %v594
  %627 = vmatprep.subr.mxu0 0.0
  %628 = vmatpush1.msra.mxu0 %v595
  %629 = vmatprep.subr.mxu0 0.0
  %630 = vmatpush1.msra.mxu0 %v596
  %631 = vmatprep.subr.mxu0 0.0
  %632 = vmatpush1.msra.mxu0 %v597
  %633 = vmatprep.subr.mxu0 0.0
  %634 = vmatpush1.msra.mxu0 %v598
  %635 = vmatprep.subr.mxu0 0.0
  %636 = vmatpush1.msra.mxu0 %v599
  %637 = vmatprep.subr.mxu0 0.0
  %638 = vmatpush1.msra.mxu0 0.0
  %639 = vmatprep.subr.mxu0 0.0
  %640 = vmatpush1.msra.mxu0 0.0
  %641 = vmatprep.subr.mxu0 0.0
  %642 = vmatpush1.msra.mxu0 0.0
  %643 = vmatprep.subr.mxu0 0.0
  %644 = vmatpush1.msra.mxu0 0.0
  %645 = vmatprep.subr.mxu0 0.0
  %646 = vmatpush1.msra.mxu0 0.0
  %647 = vmatprep.subr.mxu0 0.0
  %648 = vmatpush1.msra.mxu0 0.0
  %649 = vmatprep.subr.mxu0 0.0
  %650 = vmatpush1.msra.mxu0 0.0
  %651 = vmatprep.subr.mxu0 0.0
  %652 = vmatpush1.msra.mxu0 0.0
  %653 = vmatprep.subr.mxu0 0.0
  %654 = vmatpush1.msra.mxu0 0.0
  %655 = vmatprep.subr.mxu0 0.0
  %656 = vmatpush1.msra.mxu0 0.0
  %657 = vmatprep.subr.mxu0 0.0
  %658 = vmatpush1.msra.mxu0 0.0
  %659 = vmatprep.subr.mxu0 0.0
  %660 = vmatpush1.msra.mxu0 0.0
  %661 = vmatprep.subr.mxu0 0.0
  %662 = vmatpush1.msra.mxu0 0.0
  %663 = vmatprep.subr.mxu0 0.0
  %664 = vmatpush1.msra.mxu0 0.0
  %665 = vmatprep.subr.mxu0 0.0
  %666 = vmatpush1.msra.mxu0 0.0
  %667 = vmatprep.subr.mxu0 0.0
  %668 = vmatpush1.msra.mxu0 0.0
  %669 = vmatprep.mubr.f32.mxu0 0.0
  %670 = vmatmul.mubr.f32.gmra.mrb[0].mxu0 %v583
  %v671 = vpop.f32.mrb[0].mxu0
  %v672 = vadd.f32 %v604, %v671
  %v673 = vpop.f32.mrb[0].mxu0
  %674 = vdwg.mxu0
  %vm675 = vcmp.gt.f32.partialorder %v672, 0.0
  %v676 = vmul.f32 %v672, 0.01
  %v677 = vsel %vm675, %v672, %v676
  %vm678 = vcmp.lt.s32.totalorder %v15, 5
  %v679 = vsel %vm678, %v677, -1e+30
  %680 = vmax.xlane.f32.xlu0 %v679
  %v681 = vpop.xlane.xlu0 %680
  %v682 = vsub.f32 %v679, %v681
  %v683 = vmul.f32 %v682, 1.442695
  %v684 = vpow.pop %v683
  %685 = vadd.xlane.f32.xlu0 %v684
  %v686 = vpop.xlane.xlu0 %685
  %v687 = vlog2.pop %v686
  %v688 = vmul.f32 %v687, 0.6931472
  %v689 = vadd.f32 %v688, %v681
  %v690 = vsub.f32 %v677, %v689
  %691 = vst [vmem:[%s3] sm:$0xff] %v690
  // Predicated region
  $region14: #{cage_forward_pallas.1} parent=0 // pred_check
    _
  $region15: #{cage_forward_pallas.1} parent=0 // pred_check_branch
    %693 = sbr.rel (0) target = $region17
  $region16: #{cage_forward_pallas.1} parent=0 // pred_region
    _
  $region17: #{cage_forward_pallas.1} parent=0 // pred_fallthru
    _
  // Predicated region
  $region18: #{cage_forward_pallas.1} parent=0 // pred_check
    _
  $region19: #{cage_forward_pallas.1} parent=0 // pred_check_branch
    %695 = sbr.rel (0) target = $region21
  $region20: #{cage_forward_pallas.1} parent=0 // pred_region
    _
  $region21: #{cage_forward_pallas.1} parent=0 // pred_fallthru
    _

</llo_original>
